<compile_context>
chip_gen: v7x
topology: tpu7x:2x2x1
jax: 0.10.0
libtpu: 0.0.40
codegen_flags: <defaults>
</compile_context>

<pallas_src>
import jax
import jax.numpy as jnp
from jax.experimental import pallas as pl
from jax.experimental.pallas import tpu as pltpu


def _round_up(n, m):
    return ((n + m - 1) // m) * m


def _pick_pixel_tile(hw, c, oc, x_bytes, max_tile=4096, vmem_budget=8 << 20):
    """Largest pixel (lane) tile: multiple of 128, double-buffered blocks within budget."""
    tile = max(128, (max_tile // 128) * 128)
    # per grid step ~ 2x (double buffer) x [input block + f32 output block]
    while tile > 128 and 2 * tile * (c * x_bytes + oc * 4) > vmem_budget:
        tile //= 2
        tile = max(128, (tile // 128) * 128)
    return min(tile, _round_up(hw, 128))


def _bottleneck_kernel(x_ref, w0_ref, w1_ref, w2_ref, c_ref, o_ref):
    """Fused 3x (channel-mix matmul -> bias -> ReLU) on one (C, TM) pixel tile."""
    f32 = jnp.float32
    x = x_ref[0]                          # (C, TM): channels on sublanes, pixels on lanes
    c = c_ref[...].astype(f32)            # (OC, 3): packed per-block bias columns
    C = x.shape[0]

    # block 0: kernel=C / stride=C conv over the pixel-major flatten == per-pixel
    # channel mix.  K=C is tiny, so use C broadcast-FMAs on the VPU; MXU for large C.
    if C <= 8:
        xf = x.astype(f32)
        w0 = w0_ref[...].astype(f32)      # (OC, C), BN scale already folded in
        h = w0[:, 0:1] * xf[0:1, :]
        for k in range(1, C):
            h = h + w0[:, k:k + 1] * xf[k:k + 1, :]
    else:
        h = jnp.dot(w0_ref[...], x.astype(w0_ref.dtype), preferred_element_type=f32)
    h = jnp.maximum(h + c[:, 0:1], 0.0)   # bias + ReLU (f32 elementwise)

    # block 1: 1x1 conv == per-pixel matmul on the MXU (bf16 operands, f32 acc).
    h = jnp.dot(w1_ref[...], h.astype(w1_ref.dtype), preferred_element_type=f32)
    h = jnp.maximum(h + c[:, 1:2], 0.0)

    # block 2: 1x1 conv.
    h = jnp.dot(w2_ref[...], h.astype(w2_ref.dtype), preferred_element_type=f32)
    h = jnp.maximum(h + c[:, 2:3], 0.0)
    # TODO(synk): final-block activation assumed ReLU like the other blocks.

    o_ref[0] = h.astype(o_ref.dtype)


def bottleneck_forward(x, params, *, weight_dtype=jnp.bfloat16,
                       max_tile=4096, vmem_limit_bytes=32 * 1024 * 1024):
    """x: (B, C, H, W) float32. params: folded weights/biases. Returns (B, OC, H, W)."""
    B, C, H, W = x.shape
    OC = params["w0"].shape[0]
    HW = H * W

    # spatial_flatten: NCHW -> (B, C, H*W) is a plain reshape (no transpose); the
    # kernel=C/stride=C conv over the pixel-major flatten is a per-pixel channel mix.
    x3 = x.reshape(B, C, HW)

    TM = _pick_pixel_tile(HW, C, OC, x3.dtype.itemsize, max_tile=max_tile)
    # v7x has 2 TensorCores: keep >= 2 parallel grid steps when possible.
    if B * pl.cdiv(HW, TM) < 2 and TM > 128:
        TM = max(128, ((TM // 2) // 128) * 128)

    HWp = _round_up(HW, TM)               # pad pixel axis to a lane-dense multiple of TM
    if HWp != HW:
        x3 = jnp.pad(x3, ((0, 0), (0, 0), (0, HWp - HW)))

    grid = (B, HWp // TM)

    w0 = params["w0"].astype(weight_dtype)
    w1 = params["w1"].astype(weight_dtype)
    w2 = params["w2"].astype(weight_dtype)
    c_all = params["c"].astype(jnp.float32)

    def rep(shape):                        # small operand replicated to every grid step
        return pl.BlockSpec(shape, lambda b, j: (0, 0))

    out = pl.pallas_call(
        _bottleneck_kernel,
        out_shape=jax.ShapeDtypeStruct((B, OC, HWp), jnp.float32),
        grid_spec=pltpu.PrefetchScalarGridSpec(
            num_scalar_prefetch=0,
            grid=grid,
            in_specs=[
                pl.BlockSpec((1, C, TM), lambda b, j: (b, 0, j)),
                rep((OC, C)),
                rep((OC, OC)),
                rep((OC, OC)),
                rep((OC, 3)),
            ],
            out_specs=pl.BlockSpec((1, OC, TM), lambda b, j: (b, 0, j)),
        ),
        compiler_params=pltpu.CompilerParams(
            dimension_semantics=("parallel", "parallel"),
            vmem_limit_bytes=vmem_limit_bytes,
        ),
    )(x3, w0, w1, w2, c_all)

    if HWp != HW:
        out = out[:, :, :HW]
    # channel_recover: (B, OC, H*W) is already NCHW-ordered -> plain reshape.
    return out.reshape(B, OC, H, W)


def make_params(key, in_channels=4, out_channels=32, eps=1e-5):
    """Synthetic parameters matching the PyTorch module's shapes, with BN(eval)
    folded:  relu(a*(W@x + b_conv) + (beta - a*mean))  ==  relu((a⊙W)@x + c),
    a = gamma/sqrt(var+eps),  c = a*b_conv + beta - a*mean.
    Weights stored as (OC, IC) matmul matrices (channels-on-sublane layout)."""
    OC, C = out_channels, in_channels
    ks = jax.random.split(key, 12)
    shapes_w = {"w0": (OC, C), "w1": (OC, OC), "w2": (OC, OC)}
    raw_w = {name: (0.1 * jax.random.normal(ks[i], shapes_w[name])).astype(jnp.float32)
             for i, name in enumerate(("w0", "w1", "w2"))}
    params = {}
    c_cols = []
    for i, name in enumerate(("w0", "w1", "w2")):
        bias = (0.05 * jax.random.normal(ks[3 + i], (OC,))).astype(jnp.float32)
        gamma = (1.0 + 0.1 * jax.random.normal(ks[6 + i], (OC,))).astype(jnp.float32)
        beta = (0.05 * jax.random.normal(ks[9 + i], (OC,))).astype(jnp.float32)
        mean = jnp.zeros((OC,), jnp.float32)   # running stats (eval mode)
        var = jnp.ones((OC,), jnp.float32)
        a = gamma / jnp.sqrt(var + eps)
        params[name] = a[:, None] * raw_w[name]          # fold BN scale into weights
        c_cols.append(a * bias + (beta - a * mean))
    params["c"] = jnp.stack(c_cols, axis=1)               # (OC, 3) packed biases
    return params


def bottleneck_reference(x, params, *, weight_dtype=jnp.bfloat16):
    """Pure-jnp reference replicating the kernel's numeric path (bf16 MXU operands,
    f32 accumulation and elementwise)."""
    B, C, H, W = x.shape
    OC = params["w0"].shape[0]
    f32 = jnp.float32
    h = x.reshape(B, C, H * W).astype(f32)
    for i in range(3):
        w = params[f"w{i}"].astype(weight_dtype).astype(f32)
        if i > 0 or C > 8:                 # kernel casts MXU operands to weight dtype
            h = h.astype(weight_dtype).astype(f32)
        h = jnp.einsum("oc,bct->bot", w, h)
        h = jnp.maximum(h + params["c"][:, i][None, :, None], 0.0)
    return h.reshape(B, OC, H, W)


if __name__ == "__main__":
    key = jax.random.PRNGKey(0)
    k_x, k_p = jax.random.split(key)

    B, C, H, W = 2, 4, 16, 16          # in_channels=4, spatial 16x16
    OC = 32                            # out_channels=32, repeat=3

    x = jax.random.normal(k_x, (B, C, H, W), dtype=jnp.float32)
    params = make_params(k_p, in_channels=C, out_channels=OC)

    y = jax.jit(bottleneck_forward)(x, params)
    y = jax.block_until_ready(y)

    y_ref = bottleneck_reference(x, params)
    assert y.shape == (B, OC, H, W), y.shape
    assert jnp.allclose(y, y_ref, atol=2e-3, rtol=2e-3), float(jnp.max(jnp.abs(y - y_ref)))

    print("KERNEL_OK")
</pallas_src>

<mosaic_0001>
module attributes {stable_mosaic.version = 11 : i64} {
  func.func @_bottleneck_kernel(%arg0: i32, %arg1: i32, %arg2: memref<1x4x256xf32, #tpu.memory_space<vmem>>, %arg3: memref<32x4xbf16, #tpu.memory_space<vmem>>, %arg4: memref<32x32xbf16, #tpu.memory_space<vmem>>, %arg5: memref<32x32xbf16, #tpu.memory_space<vmem>>, %arg6: memref<32x3xf32, #tpu.memory_space<vmem>>, %arg7: memref<1x32x256xf32, #tpu.memory_space<vmem>>) attributes {dimension_semantics = [#tpu.dimension_semantics<parallel>, #tpu.dimension_semantics<parallel>], iteration_bounds = array<i64: 2, 1>, scalar_prefetch = 0 : i64, scratch_operands = 0 : i64, tpu.core_type = #tpu.core_type<tc>, window_params = [{transform_indices = @transform_0, window_bounds = array<i64: 1, 4, 256>}, {pipeline_mode = #tpu.pipeline_mode<synchronous>, transform_indices = @transform_1, window_bounds = array<i64: 32, 4>}, {pipeline_mode = #tpu.pipeline_mode<synchronous>, transform_indices = @transform_2, window_bounds = array<i64: 32, 32>}, {pipeline_mode = #tpu.pipeline_mode<synchronous>, transform_indices = @transform_3, window_bounds = array<i64: 32, 32>}, {pipeline_mode = #tpu.pipeline_mode<synchronous>, transform_indices = @transform_4, window_bounds = array<i64: 32, 3>}, {transform_indices = @transform_5, window_bounds = array<i64: 1, 32, 256>}]} {
    %c0 = arith.constant 0 : index
    %c0_0 = arith.constant 0 : index
    %c0_1 = arith.constant 0 : index
    %0 = vector.load %arg2[%c0, %c0_0, %c0_1] : memref<1x4x256xf32, #tpu.memory_space<vmem>>, vector<1x4x256xf32>
    %1 = vector.shape_cast %0 : vector<1x4x256xf32> to vector<4x256xf32>
    %c0_2 = arith.constant 0 : index
    %c0_3 = arith.constant 0 : index
    %2 = vector.load %arg6[%c0_2, %c0_3] : memref<32x3xf32, #tpu.memory_space<vmem>>, vector<32x3xf32>
    %c0_4 = arith.constant 0 : index
    %c0_5 = arith.constant 0 : index
    %3 = vector.load %arg3[%c0_4, %c0_5] : memref<32x4xbf16, #tpu.memory_space<vmem>>, vector<32x4xbf16>
    %4 = arith.extf %3 : vector<32x4xbf16> to vector<32x4xf32>
    %5 = vector.extract_strided_slice %4 {offsets = [0, 0], sizes = [32, 1], strides = [1, 1]} : vector<32x4xf32> to vector<32x1xf32>
    %6 = vector.extract_strided_slice %1 {offsets = [0, 0], sizes = [1, 256], strides = [1, 1]} : vector<4x256xf32> to vector<1x256xf32>
    %7 = vector.broadcast %5 : vector<32x1xf32> to vector<32x256xf32>
    %8 = vector.broadcast %6 : vector<1x256xf32> to vector<32x256xf32>
    %9 = arith.mulf %7, %8 : vector<32x256xf32>
    %10 = vector.extract_strided_slice %4 {offsets = [0, 1], sizes = [32, 1], strides = [1, 1]} : vector<32x4xf32> to vector<32x1xf32>
    %11 = vector.extract_strided_slice %1 {offsets = [1, 0], sizes = [1, 256], strides = [1, 1]} : vector<4x256xf32> to vector<1x256xf32>
    %12 = vector.broadcast %10 : vector<32x1xf32> to vector<32x256xf32>
    %13 = vector.broadcast %11 : vector<1x256xf32> to vector<32x256xf32>
    %14 = arith.mulf %12, %13 : vector<32x256xf32>
    %15 = arith.addf %9, %14 : vector<32x256xf32>
    %16 = vector.extract_strided_slice %4 {offsets = [0, 2], sizes = [32, 1], strides = [1, 1]} : vector<32x4xf32> to vector<32x1xf32>
    %17 = vector.extract_strided_slice %1 {offsets = [2, 0], sizes = [1, 256], strides = [1, 1]} : vector<4x256xf32> to vector<1x256xf32>
    %18 = vector.broadcast %16 : vector<32x1xf32> to vector<32x256xf32>
    %19 = vector.broadcast %17 : vector<1x256xf32> to vector<32x256xf32>
    %20 = arith.mulf %18, %19 : vector<32x256xf32>
    %21 = arith.addf %15, %20 : vector<32x256xf32>
    %22 = vector.extract_strided_slice %4 {offsets = [0, 3], sizes = [32, 1], strides = [1, 1]} : vector<32x4xf32> to vector<32x1xf32>
    %23 = vector.extract_strided_slice %1 {offsets = [3, 0], sizes = [1, 256], strides = [1, 1]} : vector<4x256xf32> to vector<1x256xf32>
    %24 = vector.broadcast %22 : vector<32x1xf32> to vector<32x256xf32>
    %25 = vector.broadcast %23 : vector<1x256xf32> to vector<32x256xf32>
    %26 = arith.mulf %24, %25 : vector<32x256xf32>
    %27 = arith.addf %21, %26 : vector<32x256xf32>
    %28 = vector.extract_strided_slice %2 {offsets = [0, 0], sizes = [32, 1], strides = [1, 1]} : vector<32x3xf32> to vector<32x1xf32>
    %29 = vector.broadcast %28 : vector<32x1xf32> to vector<32x256xf32>
    %30 = arith.addf %27, %29 : vector<32x256xf32>
    %cst = arith.constant 0.000000e+00 : f32
    %31 = vector.broadcast %cst : f32 to vector<32x256xf32>
    %32 = arith.maximumf %30, %31 : vector<32x256xf32>
    %c0_6 = arith.constant 0 : index
    %c0_7 = arith.constant 0 : index
    %33 = vector.load %arg4[%c0_6, %c0_7] : memref<32x32xbf16, #tpu.memory_space<vmem>>, vector<32x32xbf16>
    %34 = arith.truncf %32 : vector<32x256xf32> to vector<32x256xbf16>
    %cst_8 = arith.constant dense<0.000000e+00> : vector<32x256xf32>
    %35 = tpu.matmul %33, %34, %cst_8 {dimension_numbers = #tpu.dot_dimension_numbers<[1], [0], [0], [1], [0, 0, 1, 1], [], []>} : vector<32x32xbf16>, vector<32x256xbf16>, vector<32x256xf32> -> vector<32x256xf32>
    %36 = vector.extract_strided_slice %2 {offsets = [0, 1], sizes = [32, 1], strides = [1, 1]} : vector<32x3xf32> to vector<32x1xf32>
    %37 = vector.broadcast %36 : vector<32x1xf32> to vector<32x256xf32>
    %38 = arith.addf %35, %37 : vector<32x256xf32>
    %cst_9 = arith.constant 0.000000e+00 : f32
    %39 = vector.broadcast %cst_9 : f32 to vector<32x256xf32>
    %40 = arith.maximumf %38, %39 : vector<32x256xf32>
    %c0_10 = arith.constant 0 : index
    %c0_11 = arith.constant 0 : index
    %41 = vector.load %arg5[%c0_10, %c0_11] : memref<32x32xbf16, #tpu.memory_space<vmem>>, vector<32x32xbf16>
    %42 = arith.truncf %40 : vector<32x256xf32> to vector<32x256xbf16>
    %cst_12 = arith.constant dense<0.000000e+00> : vector<32x256xf32>
    %43 = tpu.matmul %41, %42, %cst_12 {dimension_numbers = #tpu.dot_dimension_numbers<[1], [0], [0], [1], [0, 0, 1, 1], [], []>} : vector<32x32xbf16>, vector<32x256xbf16>, vector<32x256xf32> -> vector<32x256xf32>
    %44 = vector.extract_strided_slice %2 {offsets = [0, 2], sizes = [32, 1], strides = [1, 1]} : vector<32x3xf32> to vector<32x1xf32>
    %45 = vector.broadcast %44 : vector<32x1xf32> to vector<32x256xf32>
    %46 = arith.addf %43, %45 : vector<32x256xf32>
    %cst_13 = arith.constant 0.000000e+00 : f32
    %47 = vector.broadcast %cst_13 : f32 to vector<32x256xf32>
    %48 = arith.maximumf %46, %47 : vector<32x256xf32>
    %c0_14 = arith.constant 0 : index
    %c0_15 = arith.constant 0 : index
    %c0_16 = arith.constant 0 : index
    %49 = vector.load %arg7[%c0_14, %c0_15, %c0_16] : memref<1x32x256xf32, #tpu.memory_space<vmem>>, vector<1x32x256xf32>
    %50 = vector.shape_cast %49 : vector<1x32x256xf32> to vector<32x256xf32>
    %51 = vector.shape_cast %48 : vector<32x256xf32> to vector<1x32x256xf32>
    tpu.vector_store %arg7[%c0_14, %c0_15, %c0_16], %51 {strides = array<i32>} : memref<1x32x256xf32, #tpu.memory_space<vmem>>, vector<1x32x256xf32>,
    return
  }
  func.func @transform_0(%arg0: i32, %arg1: i32) -> (i32, i32, i32) {
    %c0_i32 = arith.constant 0 : i32
    %c0_i32_0 = arith.constant 0 : i32
    return %arg0, %c0_i32, %arg1 : i32, i32, i32
  }
  func.func @transform_1(%arg0: i32, %arg1: i32) -> (i32, i32) {
    %c0_i32 = arith.constant 0 : i32
    %c0_i32_0 = arith.constant 0 : i32
    %c0_i32_1 = arith.constant 0 : i32
    return %c0_i32, %c0_i32_0 : i32, i32
  }
  func.func @transform_2(%arg0: i32, %arg1: i32) -> (i32, i32) {
    %c0_i32 = arith.constant 0 : i32
    %c0_i32_0 = arith.constant 0 : i32
    %c0_i32_1 = arith.constant 0 : i32
    return %c0_i32, %c0_i32_0 : i32, i32
  }
  func.func @transform_3(%arg0: i32, %arg1: i32) -> (i32, i32) {
    %c0_i32 = arith.constant 0 : i32
    %c0_i32_0 = arith.constant 0 : i32
    %c0_i32_1 = arith.constant 0 : i32
    return %c0_i32, %c0_i32_0 : i32, i32
  }
  func.func @transform_4(%arg0: i32, %arg1: i32) -> (i32, i32) {
    %c0_i32 = arith.constant 0 : i32
    %c0_i32_0 = arith.constant 0 : i32
    %c0_i32_1 = arith.constant 0 : i32
    return %c0_i32, %c0_i32_0 : i32, i32
  }
  func.func @transform_5(%arg0: i32, %arg1: i32) -> (i32, i32, i32) {
    %c0_i32 = arith.constant 0 : i32
    %c0_i32_0 = arith.constant 0 : i32
    return %arg0, %c0_i32, %arg1 : i32, i32, i32
  }
}

</mosaic_0001>

<llo_original>
// kernel: bottleneck_forward.1
$region0: #{bottleneck_forward.1}
  #allocation0 [shape = 'u32[]', space=smem, size = 0x4, offset = 0x4, fixed_abs, tag = 'smem constant byte address 0x4 - core index']
  #allocation1 [shape = 'u32[144,128]{1,0:T(1,128)}', space=vmem, size = 0x12000, scoped, tag = 'internal scratch']
  %s0 = inlined_call_operand.vmem [shape: f32[2,4,256], index: 0, kind: input, shape index: {}]
  %s1 = inlined_call_operand.vmem [shape: bf16[32,4], index: 1, kind: input, shape index: {}]
  %s2 = inlined_call_operand.vmem [shape: bf16[32,32], index: 2, kind: input, shape index: {}]
  %s3 = inlined_call_operand.vmem [shape: bf16[32,32], index: 3, kind: input, shape index: {}]
  %s4 = inlined_call_operand.vmem [shape: f32[32,3], index: 4, kind: input, shape index: {}]
  %s5 = inlined_call_operand.vmem [shape: f32[2,32,256], index: 5, kind: output, shape index: {}]
  %s6 = sld [smem:[#allocation0]]
  $region53: #{bottleneck_forward.1} parent=0
    _
  %s8 = ssub.s32 1, %s6
  %s9 = scalar_select 0, %s8, %s6
  loop: start=0, step=1, limit=4
  $region2: #{bottleneck_forward.1} parent=0 // loop_pre_header
    _
  $region3: #{bottleneck_forward.1} parent=0 // loop_header
    %s11 = sphi 0, %s15
    %p12 = scmp.ge.s32.totalorder %s11, 4
    %s18 = sphi 0, %s30
    %s19 = sphi 0, %s26
    %s20 = sphi 0, %s18
    %s21 = sphi 0, %s19
    %s22 = sphi 0, %s20
    %s23 = sphi 0, %s21
    %s35 = sphi 0, %s37
    %s38 = sphi 0, %s35
    %s39 = sphi 0, %s38
    %s55 = sphi 0, %s39
    %s59 = sphi 0, %s59
    %s61 = sphi 0, %s59
    %s62 = sphi 0, %s61
    %s76 = sphi 0, %s62
    %s80 = sphi 0, %s80
    %s82 = sphi 0, %s80
    %s83 = sphi 0, %s82
    %s97 = sphi 0, %s83
    %s101 = sphi 0, %s101
    %s103 = sphi 0, %s101
    %s104 = sphi 0, %s103
    %s118 = sphi 0, %s104
    %s122 = sphi 0, %s122
    %s124 = sphi 0, %s122
    %s125 = sphi 0, %s124
    %s139 = sphi 0, %s125
    %s147 = sphi 0, %s149
    %s150 = sphi 0, %s147
    %s151 = sphi 0, %s150
    %s167 = sphi 0, %s151
  $region4: #{bottleneck_forward.1} parent=0 // loop_header_branch
    %14 = sbr.rel (%p12) target = $region8
  $region5: #{bottleneck_forward.1} parent=0 // loop_body
    %s16 = ssub.s32 %s11, 1
    %s17 = ssub.s32 %s11, 2
    %s24 = sadd.s32 1, %s19
    %p25 = scmp.ge.s32.totalorder %s24, 1
    %s26 = scalar_select %p25, 0, %s24
    %s27 = sadd.s32 1, %s18
    %s28 = scalar_select %p25, %s27, %s18
    %p29 = scmp.ge.s32.totalorder %s28, 2
    %s30 = scalar_select %p29, 0, %s28
    %s31 = ssub.s32 %s18, %s30
    %s32 = ssub.s32 %s19, %s26
    %s33 = sor.u32 %s31, %s32
    %p34 = scmp.eq.s32.totalorder %s33, 0
    %s36 = sadd.s32 %s35, 1
    %s37 = scalar_select %p34, %s35, %s36
    %p40 = pneg %p34
    %p41 = scmp.eq.s32.totalorder %s11, 1
    %p42 = por %p40, %p41
    %p43 = scmp.ne.s32.totalorder %s35, %s38
    %p44 = scmp.eq.s32.totalorder %s11, 0
    %p45 = por %p43, %p44
    %p46 = scmp.ne.s32.totalorder %s35, %s38
    %p47 = scmp.eq.s32.totalorder %s16, 1
    %p48 = por %p46, %p47
    %p49 = scmp.ne.s32.totalorder %s38, %s39
    %p50 = scmp.eq.s32.totalorder %s16, 0
    %p51 = por %p49, %p50
    %p52 = scmp.ne.s32.totalorder %s38, %s39
    %p53 = scmp.eq.s32.totalorder %s17, 1
    %p54 = por %p52, %p53
    %p56 = scmp.ne.s32.totalorder %s39, %s55
    %p57 = scmp.eq.s32.totalorder %s17, 0
    %p58 = por %p56, %p57
    %s60 = sadd.s32 %s59, 1
    %p63 = scmp.eq.s32.totalorder %s11, 1
    %p64 = scmp.ne.s32.totalorder %s59, %s61
    %p65 = scmp.eq.s32.totalorder %s11, 0
    %p66 = por %p64, %p65
    %p67 = scmp.ne.s32.totalorder %s59, %s61
    %p68 = scmp.eq.s32.totalorder %s16, 1
    %p69 = por %p67, %p68
    %p70 = scmp.ne.s32.totalorder %s61, %s62
    %p71 = scmp.eq.s32.totalorder %s16, 0
    %p72 = por %p70, %p71
    %p73 = scmp.ne.s32.totalorder %s61, %s62
    %p74 = scmp.eq.s32.totalorder %s17, 1
    %p75 = por %p73, %p74
    %p77 = scmp.ne.s32.totalorder %s62, %s76
    %p78 = scmp.eq.s32.totalorder %s17, 0
    %p79 = por %p77, %p78
    %s81 = sadd.s32 %s80, 1
    %p84 = scmp.eq.s32.totalorder %s11, 1
    %p85 = scmp.ne.s32.totalorder %s80, %s82
    %p86 = scmp.eq.s32.totalorder %s11, 0
    %p87 = por %p85, %p86
    %p88 = scmp.ne.s32.totalorder %s80, %s82
    %p89 = scmp.eq.s32.totalorder %s16, 1
    %p90 = por %p88, %p89
    %p91 = scmp.ne.s32.totalorder %s82, %s83
    %p92 = scmp.eq.s32.totalorder %s16, 0
    %p93 = por %p91, %p92
    %p94 = scmp.ne.s32.totalorder %s82, %s83
    %p95 = scmp.eq.s32.totalorder %s17, 1
    %p96 = por %p94, %p95
    %p98 = scmp.ne.s32.totalorder %s83, %s97
    %p99 = scmp.eq.s32.totalorder %s17, 0
    %p100 = por %p98, %p99
    %s102 = sadd.s32 %s101, 1
    %p105 = scmp.eq.s32.totalorder %s11, 1
    %p106 = scmp.ne.s32.totalorder %s101, %s103
    %p107 = scmp.eq.s32.totalorder %s11, 0
    %p108 = por %p106, %p107
    %p109 = scmp.ne.s32.totalorder %s101, %s103
    %p110 = scmp.eq.s32.totalorder %s16, 1
    %p111 = por %p109, %p110
    %p112 = scmp.ne.s32.totalorder %s103, %s104
    %p113 = scmp.eq.s32.totalorder %s16, 0
    %p114 = por %p112, %p113
    %p115 = scmp.ne.s32.totalorder %s103, %s104
    %p116 = scmp.eq.s32.totalorder %s17, 1
    %p117 = por %p115, %p116
    %p119 = scmp.ne.s32.totalorder %s104, %s118
    %p120 = scmp.eq.s32.totalorder %s17, 0
    %p121 = por %p119, %p120
    %s123 = sadd.s32 %s122, 1
    %p126 = scmp.eq.s32.totalorder %s11, 1
    %p127 = scmp.ne.s32.totalorder %s122, %s124
    %p128 = scmp.eq.s32.totalorder %s11, 0
    %p129 = por %p127, %p128
    %p130 = scmp.ne.s32.totalorder %s122, %s124
    %p131 = scmp.eq.s32.totalorder %s16, 1
    %p132 = por %p130, %p131
    %p133 = scmp.ne.s32.totalorder %s124, %s125
    %p134 = scmp.eq.s32.totalorder %s16, 0
    %p135 = por %p133, %p134
    %p136 = scmp.ne.s32.totalorder %s124, %s125
    %p137 = scmp.eq.s32.totalorder %s17, 1
    %p138 = por %p136, %p137
    %p140 = scmp.ne.s32.totalorder %s125, %s139
    %p141 = scmp.eq.s32.totalorder %s17, 0
    %p142 = por %p140, %p141
    %s143 = ssub.s32 %s18, %s30
    %s144 = ssub.s32 %s19, %s26
    %s145 = sor.u32 %s143, %s144
    %p146 = scmp.eq.s32.totalorder %s145, 0
    %s148 = sadd.s32 %s147, 1
    %s149 = scalar_select %p146, %s147, %s148
    %p152 = pneg %p146
    %p153 = scmp.eq.s32.totalorder %s11, 1
    %p154 = por %p152, %p153
    %p155 = scmp.ne.s32.totalorder %s147, %s150
    %p156 = scmp.eq.s32.totalorder %s11, 0
    %p157 = por %p155, %p156
    %p158 = scmp.ne.s32.totalorder %s147, %s150
    %p159 = scmp.eq.s32.totalorder %s16, 1
    %p160 = por %p158, %p159
    %p161 = scmp.ne.s32.totalorder %s150, %s151
    %p162 = scmp.eq.s32.totalorder %s16, 0
    %p163 = por %p161, %p162
    %p164 = scmp.ne.s32.totalorder %s150, %s151
    %p165 = scmp.eq.s32.totalorder %s17, 1
    %p166 = por %p164, %p165
    %p168 = scmp.ne.s32.totalorder %s151, %s167
    %p169 = scmp.eq.s32.totalorder %s17, 0
    %p170 = por %p168, %p169
    %p171 = scmp.le.s32.totalorder 1, %s11
    %p172 = scmp.lt.s32.totalorder %s11, 3
    %p173 = pnand %p171, %p172
    %p174 = pneg %p173
    // Predicated region
    $region9: #{bottleneck_forward.1} parent=5 // pred_check
      _
    $region10: #{bottleneck_forward.1} parent=5 // pred_check_branch
      %176 = sbr.rel (%p173) target = $region12
    $region11: #{bottleneck_forward.1} parent=5 // pred_region
      %s177 = ssub.s32 %s11, 1
      // Predicated region
      $region13: #{bottleneck_forward.1} parent=11 // pred_check
        %p178 = pneg %p72
      $region14: #{bottleneck_forward.1} parent=11 // pred_check_branch
        %180 = sbr.rel (%p178) target = $region16
      $region15: #{bottleneck_forward.1} parent=11 // pred_region
        _
      $region16: #{bottleneck_forward.1} parent=11 // pred_fallthru
        _
      // Predicated region
      $region17: #{bottleneck_forward.1} parent=11 // pred_check
        %p181 = pneg %p93
      $region18: #{bottleneck_forward.1} parent=11 // pred_check_branch
        %183 = sbr.rel (%p181) target = $region20
      $region19: #{bottleneck_forward.1} parent=11 // pred_region
        _
      $region20: #{bottleneck_forward.1} parent=11 // pred_fallthru
        _
      // Predicated region
      $region21: #{bottleneck_forward.1} parent=11 // pred_check
        %p184 = pneg %p114
      $region22: #{bottleneck_forward.1} parent=11 // pred_check_branch
        %186 = sbr.rel (%p184) target = $region24
      $region23: #{bottleneck_forward.1} parent=11 // pred_region
        _
      $region24: #{bottleneck_forward.1} parent=11 // pred_fallthru
        _
      // Predicated region
      $region25: #{bottleneck_forward.1} parent=11 // pred_check
        %p187 = pneg %p135
      $region26: #{bottleneck_forward.1} parent=11 // pred_check_branch
        %189 = sbr.rel (%p187) target = $region28
      $region27: #{bottleneck_forward.1} parent=11 // pred_region
        _
      $region28: #{bottleneck_forward.1} parent=11 // pred_fallthru
        _
    $region12: #{bottleneck_forward.1} parent=5 // pred_fallthru
      _
    %p190 = scmp.lt.s32.totalorder %s11, 2
    // Predicated region
    $region29: #{bottleneck_forward.1} parent=5 // pred_check
      %p191 = pneg %p190
    $region30: #{bottleneck_forward.1} parent=5 // pred_check_branch
      %193 = sbr.rel (%p191) target = $region32
    $region31: #{bottleneck_forward.1} parent=5 // pred_region
      // Predicated region
      $region33: #{bottleneck_forward.1} parent=31 // pred_check
        %p194 = pneg %p45
      $region34: #{bottleneck_forward.1} parent=31 // pred_check_branch
        %196 = sbr.rel (%p194) target = $region36
      $region35: #{bottleneck_forward.1} parent=31 // pred_region
        %s197 = smul.u32 2, %s19
        %p198 = scmp.lt.s32.totalorder %s18, 1
        %s199 = scalar_select %p198, %s18, 1
        %p200 = scmp.lt.s32.totalorder %s197, 1
        %s201 = scalar_select %p200, %s197, 1
        %s202 = smul.addr %s199, 2
        %s203 = sadd.s32 %s201, %s202
        %s204 = smul.addr %s203, 4
        %s205 = scalar_lea.vmem %s0, %s204
        %s206 = smul.u32 2, %s19
      $region36: #{bottleneck_forward.1} parent=31 // pred_fallthru
        _
    $region32: #{bottleneck_forward.1} parent=5 // pred_fallthru
      _
    %p207 = scmp.le.s32.totalorder 1, %s11
    %p208 = scmp.lt.s32.totalorder %s11, 3
    %p209 = pnand %p207, %p208
    %p210 = pneg %p209
    // Predicated region
    $region37: #{bottleneck_forward.1} parent=5 // pred_check
      _
    $region38: #{bottleneck_forward.1} parent=5 // pred_check_branch
      %212 = sbr.rel (%p209) target = $region40
    $region39: #{bottleneck_forward.1} parent=5 // pred_region
      %s213 = ssub.s32 %s11, 1
      %s214 = smul.u32 2, %s21
      %p215 = scmp.lt.s32.totalorder %s20, 1
      %s216 = scalar_select %p215, %s20, 1
      %p217 = scmp.lt.s32.totalorder %s214, 1
      %s218 = scalar_select %p217, %s214, 1
      %s219 = smul.addr %s216, 2
      %s220 = sadd.s32 %s218, %s219
      %s221 = smul.addr %s220, 4
      %s222 = scalar_lea.vmem %s0, %s221
      %p223 = pneg %p51
      %p224 = pneg %p48
      %p225 = pneg %p72
      %p226 = pneg %p69
      %p227 = pneg %p93
      %p228 = pneg %p90
      %p229 = pneg %p114
      %p230 = pneg %p111
      %p231 = pneg %p135
      %p232 = pneg %p132
      %p233 = pneg %p163
      %p234 = pneg %p160
      %s235 = smul.u32 2, %s21
      %p236 = scmp.lt.s32.totalorder %s20, 1
      %s237 = scalar_select %p236, %s20, 1
      %p238 = scmp.lt.s32.totalorder %s235, 1
      %s239 = scalar_select %p238, %s235, 1
      %s240 = smul.addr %s237, 8
      %s241 = sadd.s32 %s239, %s240
      %s242 = smul.addr %s241, 8
      %s243 = scalar_lea.vmem %s5, %s242
      %s244 = smul.u32 2, %s21
      %p245 = scmp.lt.s32.totalorder %s20, 1
      %s246 = scalar_select %p245, %s20, 1
      %p247 = scmp.lt.s32.totalorder %s244, 1
      %s248 = scalar_select %p247, %s244, 1
      %s249 = smul.addr %s246, 2
      %s250 = sadd.s32 %s248, %s249
      %s251 = smul.addr %s250, 4
      %s252 = scalar_lea.vmem %s0, %s251
      %s253 = smul.u32 2, %s21
      %s254 = smul.u32 2, %s21
      %p255 = scmp.lt.s32.totalorder %s20, 1
      %s256 = scalar_select %p255, %s20, 1
      %p257 = scmp.lt.s32.totalorder %s254, 1
      %s258 = scalar_select %p257, %s254, 1
      %s259 = smul.addr %s256, 8
      %s260 = sadd.s32 %s258, %s259
      %s261 = smul.addr %s260, 8
      %s262 = scalar_lea.vmem %s5, %s261
      %s263 = smul.u32 2, %s21
      %v265 = vld [vmem:[%s252] sm:$0xff]
      %v266 = vld [vmem:[%s4] sm:$0xff]
      %v267 = vld [vmem:[%s4 + $0x8] sm:$0xff]
      %v268 = vld [vmem:[%s4 + $0x10] sm:$0xff]
      %v269 = vld [vmem:[%s4 + $0x18] sm:$0xff]
      %v270 = vld [vmem:[%s1] sm:$0xf]
      %v271 = vld [vmem:[%s1 + $0x4] sm:$0xf]
      %v272 = vld [vmem:[%s1 + $0x8] sm:$0xf]
      %v273 = vld [vmem:[%s1 + $0xc] sm:$0xf]
      %v274 = vunpack.c.l.bf16 %v270
      %v275 = vunpack.c.l.bf16 %v271
      %v276 = vunpack.c.l.bf16 %v272
      %v277 = vunpack.c.l.bf16 %v273
      %279 = vset.pattern.permute.xlu0 0
      %280 = vperm.xlu0 %279, %v274
      %v281 = vpop.permute.xlu0 %280
      %284 = vset.pattern.permute.xlu0 0
      %285 = vperm.xlu0 %284, %v275
      %v286 = vpop.permute.xlu0 %285
      %289 = vset.pattern.permute.xlu0 0
      %290 = vperm.xlu0 %289, %v276
      %v291 = vpop.permute.xlu0 %290
      %294 = vset.pattern.permute.xlu0 0
      %295 = vperm.xlu0 %294, %v277
      %v296 = vpop.permute.xlu0 %295
      %v299 = vlaneseq
      %v300 = vshrl.u32 %v299, 7
      %v301 = vsub.s32 0, %v300
      %v302 = vrot.slane %v265, %v301
      %v303 = vlaneseq
      %v304 = vshrl.u32 %v303, 7
      %v305 = vsub.s32 4, %v304
      %v306 = vrot.slane %v265, %v305
      %v309 = vlaneseq
      %v310 = vshrl.u32 %v309, 7
      %v311 = vsub.s32 0, %v310
      %v312 = vrot.slane %v302, %v311
      %v313 = vlaneseq
      %v314 = vshrl.u32 %v313, 7
      %v315 = vsub.s32 0, %v314
      %v316 = vrot.slane %v306, %v315
      %v317 = vmul.f32 %v281, %v312
      %v318 = vmul.f32 %v281, %v316
      %v319 = vmul.f32 %v286, %v312
      %v320 = vmul.f32 %v286, %v316
      %v321 = vmul.f32 %v291, %v312
      %v322 = vmul.f32 %v291, %v316
      %v323 = vmul.f32 %v296, %v312
      %v324 = vmul.f32 %v296, %v316
      %325 = vset.pattern.permute.xlu0 1
      %326 = vperm.xlu0 %325, %v274
      %v327 = vpop.permute.xlu0 %326
      %329 = vset.pattern.permute.xlu0 1
      %330 = vperm.xlu0 %329, %v275
      %v331 = vpop.permute.xlu0 %330
      %333 = vset.pattern.permute.xlu0 1
      %334 = vperm.xlu0 %333, %v276
      %v335 = vpop.permute.xlu0 %334
      %337 = vset.pattern.permute.xlu0 1
      %338 = vperm.xlu0 %337, %v277
      %v339 = vpop.permute.xlu0 %338
      %v341 = vlaneseq
      %v342 = vshrl.u32 %v341, 7
      %v343 = vsub.s32 1, %v342
      %v344 = vrot.slane %v265, %v343
      %v345 = vlaneseq
      %v346 = vshrl.u32 %v345, 7
      %v347 = vsub.s32 5, %v346
      %v348 = vrot.slane %v265, %v347
      %v351 = vlaneseq
      %v352 = vshrl.u32 %v351, 7
      %v353 = vsub.s32 1, %v352
      %v354 = vrot.slane %v344, %v353
      %v355 = vlaneseq
      %v356 = vshrl.u32 %v355, 7
      %v357 = vsub.s32 1, %v356
      %v358 = vrot.slane %v348, %v357
      %v359 = vmul.f32 %v327, %v354
      %v360 = vmul.f32 %v327, %v358
      %v361 = vmul.f32 %v331, %v354
      %v362 = vmul.f32 %v331, %v358
      %v363 = vmul.f32 %v335, %v354
      %v364 = vmul.f32 %v335, %v358
      %v365 = vmul.f32 %v339, %v354
      %v366 = vmul.f32 %v339, %v358
      %v367 = vadd.f32 %v317, %v359
      %v368 = vadd.f32 %v318, %v360
      %v369 = vadd.f32 %v319, %v361
      %v370 = vadd.f32 %v320, %v362
      %v371 = vadd.f32 %v321, %v363
      %v372 = vadd.f32 %v322, %v364
      %v373 = vadd.f32 %v323, %v365
      %v374 = vadd.f32 %v324, %v366
      %375 = vset.pattern.permute.xlu0 2
      %376 = vperm.xlu0 %375, %v274
      %v377 = vpop.permute.xlu0 %376
      %379 = vset.pattern.permute.xlu0 2
      %380 = vperm.xlu0 %379, %v275
      %v381 = vpop.permute.xlu0 %380
      %383 = vset.pattern.permute.xlu0 2
      %384 = vperm.xlu0 %383, %v276
      %v385 = vpop.permute.xlu0 %384
      %387 = vset.pattern.permute.xlu0 2
      %388 = vperm.xlu0 %387, %v277
      %v389 = vpop.permute.xlu0 %388
      %v391 = vlaneseq
      %v392 = vshrl.u32 %v391, 7
      %v393 = vsub.s32 2, %v392
      %v394 = vrot.slane %v265, %v393
      %v395 = vlaneseq
      %v396 = vshrl.u32 %v395, 7
      %v397 = vsub.s32 6, %v396
      %v398 = vrot.slane %v265, %v397
      %v401 = vlaneseq
      %v402 = vshrl.u32 %v401, 7
      %v403 = vsub.s32 2, %v402
      %v404 = vrot.slane %v394, %v403
      %v405 = vlaneseq
      %v406 = vshrl.u32 %v405, 7
      %v407 = vsub.s32 2, %v406
      %v408 = vrot.slane %v398, %v407
      %v409 = vmul.f32 %v377, %v404
      %v410 = vmul.f32 %v377, %v408
      %v411 = vmul.f32 %v381, %v404
      %v412 = vmul.f32 %v381, %v408
      %v413 = vmul.f32 %v385, %v404
      %v414 = vmul.f32 %v385, %v408
      %v415 = vmul.f32 %v389, %v404
      %v416 = vmul.f32 %v389, %v408
      %v417 = vadd.f32 %v367, %v409
      %v418 = vadd.f32 %v368, %v410
      %v419 = vadd.f32 %v369, %v411
      %v420 = vadd.f32 %v370, %v412
      %v421 = vadd.f32 %v371, %v413
      %v422 = vadd.f32 %v372, %v414
      %v423 = vadd.f32 %v373, %v415
      %v424 = vadd.f32 %v374, %v416
      %425 = vset.pattern.permute.xlu0 3
      %426 = vperm.xlu0 %425, %v274
      %v427 = vpop.permute.xlu0 %426
      %429 = vset.pattern.permute.xlu0 3
      %430 = vperm.xlu0 %429, %v275
      %v431 = vpop.permute.xlu0 %430
      %433 = vset.pattern.permute.xlu0 3
      %434 = vperm.xlu0 %433, %v276
      %v435 = vpop.permute.xlu0 %434
      %437 = vset.pattern.permute.xlu0 3
      %438 = vperm.xlu0 %437, %v277
      %v439 = vpop.permute.xlu0 %438
      %v441 = vlaneseq
      %v442 = vshrl.u32 %v441, 7
      %v443 = vsub.s32 3, %v442
      %v444 = vrot.slane %v265, %v443
      %v445 = vlaneseq
      %v446 = vshrl.u32 %v445, 7
      %v447 = vsub.s32 7, %v446
      %v448 = vrot.slane %v265, %v447
      %v451 = vlaneseq
      %v452 = vshrl.u32 %v451, 7
      %v453 = vsub.s32 3, %v452
      %v454 = vrot.slane %v444, %v453
      %v455 = vlaneseq
      %v456 = vshrl.u32 %v455, 7
      %v457 = vsub.s32 3, %v456
      %v458 = vrot.slane %v448, %v457
      %v459 = vmul.f32 %v427, %v454
      %v460 = vmul.f32 %v427, %v458
      %v461 = vmul.f32 %v431, %v454
      %v462 = vmul.f32 %v431, %v458
      %v463 = vmul.f32 %v435, %v454
      %v464 = vmul.f32 %v435, %v458
      %v465 = vmul.f32 %v439, %v454
      %v466 = vmul.f32 %v439, %v458
      %v467 = vadd.f32 %v417, %v459
      %v468 = vadd.f32 %v418, %v460
      %v469 = vadd.f32 %v419, %v461
      %v470 = vadd.f32 %v420, %v462
      %v471 = vadd.f32 %v421, %v463
      %v472 = vadd.f32 %v422, %v464
      %v473 = vadd.f32 %v423, %v465
      %v474 = vadd.f32 %v424, %v466
      %476 = vset.pattern.permute.xlu0 0
      %477 = vperm.xlu0 %476, %v266
      %v478 = vpop.permute.xlu0 %477
      %481 = vset.pattern.permute.xlu0 0
      %482 = vperm.xlu0 %481, %v267
      %v483 = vpop.permute.xlu0 %482
      %486 = vset.pattern.permute.xlu0 0
      %487 = vperm.xlu0 %486, %v268
      %v488 = vpop.permute.xlu0 %487
      %491 = vset.pattern.permute.xlu0 0
      %492 = vperm.xlu0 %491, %v269
      %v493 = vpop.permute.xlu0 %492
      %v495 = vadd.f32 %v467, %v478
      %v496 = vadd.f32 %v468, %v478
      %v497 = vadd.f32 %v469, %v483
      %v498 = vadd.f32 %v470, %v483
      %v499 = vadd.f32 %v471, %v488
      %v500 = vadd.f32 %v472, %v488
      %v501 = vadd.f32 %v473, %v493
      %v502 = vadd.f32 %v474, %v493
      %v503 = vmax.f32 %v495, 0.0
      %v504 = vmax.f32 %v496, 0.0
      %v505 = vmax.f32 %v497, 0.0
      %v506 = vmax.f32 %v498, 0.0
      %v507 = vmax.f32 %v499, 0.0
      %v508 = vmax.f32 %v500, 0.0
      %v509 = vmax.f32 %v501, 0.0
      %v510 = vmax.f32 %v502, 0.0
      %v511 = vld [vmem:[%s2] sm:$0xf]
      %v512 = vld [vmem:[%s2 + $0x4] sm:$0xf]
      %v513 = vld [vmem:[%s2 + $0x8] sm:$0xf]
      %v514 = vld [vmem:[%s2 + $0xc] sm:$0xf]
      %v515 = vpack.c.bf16 %v505, %v503
      %v516 = vpack.c.bf16 %v506, %v504
      %v517 = vpack.c.bf16 %v509, %v507
      %v518 = vpack.c.bf16 %v510, %v508
      %519 = vset.pattern.permute.xlu0 1
      %520 = vperm.xlu0 %519, %v266
      %v521 = vpop.permute.xlu0 %520
      %523 = vset.pattern.permute.xlu0 1
      %524 = vperm.xlu0 %523, %v267
      %v525 = vpop.permute.xlu0 %524
      %527 = vset.pattern.permute.xlu0 1
      %528 = vperm.xlu0 %527, %v268
      %v529 = vpop.permute.xlu0 %528
      %531 = vset.pattern.permute.xlu0 1
      %532 = vperm.xlu0 %531, %v269
      %v533 = vpop.permute.xlu0 %532
      %v539 = vunpack.c.l.b16 %v511
      %v540 = vunpack.c.l.b16 %v512
      %v541 = vunpack.c.l.b16 %v513
      %v542 = vunpack.c.l.b16 %v514
      %v543 = vpack.c.b16 %v540, %v539
      %v544 = vpack.c.b16 %v542, %v541
      %vm545 = vcmask 261120
      %v547 = vsel %vm545, %v543, 0
      %v550 = vsel %vm545, %v544, 0
      %552 = vmatprep.subr.bf16.mxu0 %v516
      %553 = vmatpush1.bf16.msra.mxu0 %v515
      %554 = vmatprep.subr.bf16.mxu0 %v518
      %555 = vmatpush1.bf16.msra.mxu0 %v517
      %556 = vmatprep.subr.bf16.mxu0 0
      %557 = vmatpush1.bf16.msra.mxu0 0
      %558 = vmatprep.subr.bf16.mxu0 0
      %559 = vmatpush1.bf16.msra.mxu0 0
      %560 = vmatprep.subr.bf16.mxu0 0
      %561 = vmatpush1.bf16.msra.mxu0 0
      %562 = vmatprep.subr.bf16.mxu0 0
      %563 = vmatpush1.bf16.msra.mxu0 0
      %564 = vmatprep.subr.bf16.mxu0 0
      %565 = vmatpush1.bf16.msra.mxu0 0
      %566 = vmatprep.subr.bf16.mxu0 0
      %567 = vmatpush1.bf16.msra.mxu0 0
      %568 = vmatprep.subr.bf16.mxu0 0
      %569 = vmatpush1.bf16.msra.mxu0 0
      %570 = vmatprep.subr.bf16.mxu0 0
      %571 = vmatpush1.bf16.msra.mxu0 0
      %572 = vmatprep.subr.bf16.mxu0 0
      %573 = vmatpush1.bf16.msra.mxu0 0
      %574 = vmatprep.subr.bf16.mxu0 0
      %575 = vmatpush1.bf16.msra.mxu0 0
      %576 = vmatprep.subr.bf16.mxu0 0
      %577 = vmatpush1.bf16.msra.mxu0 0
      %578 = vmatprep.subr.bf16.mxu0 0
      %579 = vmatpush1.bf16.msra.mxu0 0
      %580 = vmatprep.subr.bf16.mxu0 0
      %581 = vmatpush1.bf16.msra.mxu0 0
      %582 = vmatprep.subr.bf16.mxu0 0
      %583 = vmatpush1.bf16.msra.mxu0 0
      %584 = vmatprep.mubr.bf16.mxu0 0
      %585 = vmatmul.mubr.bf16.gmra.mrb[0].mxu0 %v547
      %v586 = vpop.f32.mrb[0].mxu0
      %v587 = vadd.f32 %v521, %v586
      %v588 = vpop.f32.mrb[0].mxu0
      %v589 = vadd.f32 %v521, %v588
      %v590 = vpop.f32.mrb[0].mxu0
      %v591 = vadd.f32 %v525, %v590
      %v592 = vpop.f32.mrb[0].mxu0
      %v593 = vadd.f32 %v525, %v592
      %594 = vmatprep.mubr.bf16.mxu0 0
      %595 = vmatmul.mubr.bf16.gmra.mrb[0].mxu0 %v550
      %v596 = vpop.f32.mrb[0].mxu0
      %v597 = vadd.f32 %v529, %v596
      %v598 = vpop.f32.mrb[0].mxu0
      %v599 = vadd.f32 %v529, %v598
      %v600 = vpop.f32.mrb[0].mxu0
      %v601 = vadd.f32 %v533, %v600
      %v602 = vpop.f32.mrb[0].mxu0
      %v603 = vadd.f32 %v533, %v602
      %604 = vdwg.mxu0
      %v605 = vmax.f32 %v587, 0.0
      %v606 = vmax.f32 %v589, 0.0
      %v607 = vmax.f32 %v591, 0.0
      %v608 = vmax.f32 %v593, 0.0
      %v609 = vmax.f32 %v597, 0.0
      %v610 = vmax.f32 %v599, 0.0
      %v611 = vmax.f32 %v601, 0.0
      %v612 = vmax.f32 %v603, 0.0
      %v613 = vld [vmem:[%s3] sm:$0xf]
      %v614 = vld [vmem:[%s3 + $0x4] sm:$0xf]
      %v615 = vld [vmem:[%s3 + $0x8] sm:$0xf]
      %v616 = vld [vmem:[%s3 + $0xc] sm:$0xf]
      %v617 = vpack.c.bf16 %v607, %v605
      %v618 = vpack.c.bf16 %v608, %v606
      %v619 = vpack.c.bf16 %v611, %v609
      %v620 = vpack.c.bf16 %v612, %v610
      %621 = vset.pattern.permute.xlu0 2
      %622 = vperm.xlu0 %621, %v266
      %v623 = vpop.permute.xlu0 %622
      %625 = vset.pattern.permute.xlu0 2
      %626 = vperm.xlu0 %625, %v267
      %v627 = vpop.permute.xlu0 %626
      %629 = vset.pattern.permute.xlu0 2
      %630 = vperm.xlu0 %629, %v268
      %v631 = vpop.permute.xlu0 %630
      %633 = vset.pattern.permute.xlu0 2
      %634 = vperm.xlu0 %633, %v269
      %v635 = vpop.permute.xlu0 %634
      %v641 = vunpack.c.l.b16 %v613
      %v642 = vunpack.c.l.b16 %v614
      %v643 = vunpack.c.l.b16 %v615
      %v644 = vunpack.c.l.b16 %v616
      %v645 = vpack.c.b16 %v642, %v641
      %v646 = vpack.c.b16 %v644, %v643
      %v648 = vsel %vm545, %v645, 0
      %v651 = vsel %vm545, %v646, 0
      %653 = vmatprep.subr.bf16.mxu0 %v618
      %654 = vmatpush1.bf16.msra.mxu0 %v617
      %655 = vmatprep.subr.bf16.mxu0 %v620
      %656 = vmatpush1.bf16.msra.mxu0 %v619
      %657 = vmatprep.subr.bf16.mxu0 0
      %658 = vmatpush1.bf16.msra.mxu0 0
      %659 = vmatprep.subr.bf16.mxu0 0
      %660 = vmatpush1.bf16.msra.mxu0 0
      %661 = vmatprep.subr.bf16.mxu0 0
      %662 = vmatpush1.bf16.msra.mxu0 0
      %663 = vmatprep.subr.bf16.mxu0 0
      %664 = vmatpush1.bf16.msra.mxu0 0
      %665 = vmatprep.subr.bf16.mxu0 0
      %666 = vmatpush1.bf16.msra.mxu0 0
      %667 = vmatprep.subr.bf16.mxu0 0
      %668 = vmatpush1.bf16.msra.mxu0 0
      %669 = vmatprep.subr.bf16.mxu0 0
      %670 = vmatpush1.bf16.msra.mxu0 0
      %671 = vmatprep.subr.bf16.mxu0 0
      %672 = vmatpush1.bf16.msra.mxu0 0
      %673 = vmatprep.subr.bf16.mxu0 0
      %674 = vmatpush1.bf16.msra.mxu0 0
      %675 = vmatprep.subr.bf16.mxu0 0
      %676 = vmatpush1.bf16.msra.mxu0 0
      %677 = vmatprep.subr.bf16.mxu0 0
      %678 = vmatpush1.bf16.msra.mxu0 0
      %679 = vmatprep.subr.bf16.mxu0 0
      %680 = vmatpush1.bf16.msra.mxu0 0
      %681 = vmatprep.subr.bf16.mxu0 0
      %682 = vmatpush1.bf16.msra.mxu0 0
      %683 = vmatprep.subr.bf16.mxu0 0
      %684 = vmatpush1.bf16.msra.mxu0 0
      %685 = vmatprep.mubr.bf16.mxu0 0
      %686 = vmatmul.mubr.bf16.gmra.mrb[0].mxu0 %v648
      %v687 = vpop.f32.mrb[0].mxu0
      %v688 = vadd.f32 %v623, %v687
      %v689 = vpop.f32.mrb[0].mxu0
      %v690 = vadd.f32 %v623, %v689
      %v691 = vpop.f32.mrb[0].mxu0
      %v692 = vadd.f32 %v627, %v691
      %v693 = vpop.f32.mrb[0].mxu0
      %v694 = vadd.f32 %v627, %v693
      %695 = vmatprep.mubr.bf16.mxu0 0
      %696 = vmatmul.mubr.bf16.gmra.mrb[0].mxu0 %v651
      %v697 = vpop.f32.mrb[0].mxu0
      %v698 = vadd.f32 %v631, %v697
      %v699 = vpop.f32.mrb[0].mxu0
      %v700 = vadd.f32 %v631, %v699
      %v701 = vpop.f32.mrb[0].mxu0
      %v702 = vadd.f32 %v635, %v701
      %v703 = vpop.f32.mrb[0].mxu0
      %v704 = vadd.f32 %v635, %v703
      %705 = vdwg.mxu0
      %v706 = vmax.f32 %v688, 0.0
      %v707 = vmax.f32 %v690, 0.0
      %v708 = vmax.f32 %v692, 0.0
      %v709 = vmax.f32 %v694, 0.0
      %v710 = vmax.f32 %v698, 0.0
      %v711 = vmax.f32 %v700, 0.0
      %v712 = vmax.f32 %v702, 0.0
      %v713 = vmax.f32 %v704, 0.0
      %714 = vst [vmem:[%s262] sm:$0xff] %v706
      %715 = vst [vmem:[%s262 + $0x8] sm:$0xff] %v707
      %716 = vst [vmem:[%s262 + $0x10] sm:$0xff] %v708
      %717 = vst [vmem:[%s262 + $0x18] sm:$0xff] %v709
      %718 = vst [vmem:[%s262 + $0x20] sm:$0xff] %v710
      %719 = vst [vmem:[%s262 + $0x28] sm:$0xff] %v711
      %720 = vst [vmem:[%s262 + $0x30] sm:$0xff] %v712
      %721 = vst [vmem:[%s262 + $0x38] sm:$0xff] %v713
      %s722 = smul.u32 2, %s21
      %p723 = scmp.lt.s32.totalorder %s20, 1
      %s724 = scalar_select %p723, %s20, 1
      %p725 = scmp.lt.s32.totalorder %s722, 1
      %s726 = scalar_select %p725, %s722, 1
      %s727 = smul.addr %s724, 8
      %s728 = sadd.s32 %s726, %s727
      %s729 = smul.addr %s728, 8
      %s730 = scalar_lea.vmem %s5, %s729
      // Predicated region
      $region41: #{bottleneck_forward.1} parent=39 // pred_check
        %p731 = pneg %p160
      $region42: #{bottleneck_forward.1} parent=39 // pred_check_branch
        %733 = sbr.rel (%p731) target = $region44
      $region43: #{bottleneck_forward.1} parent=39 // pred_region
        %s734 = smul.u32 2, %s21
      $region44: #{bottleneck_forward.1} parent=39 // pred_fallthru
        _
    $region40: #{bottleneck_forward.1} parent=5 // pred_fallthru
      _
    %p735 = scmp.le.s32.totalorder 2, %s11
    // Predicated region
    $region45: #{bottleneck_forward.1} parent=5 // pred_check
      %p736 = pneg %p735
    $region46: #{bottleneck_forward.1} parent=5 // pred_check_branch
      %738 = sbr.rel (%p736) target = $region48
    $region47: #{bottleneck_forward.1} parent=5 // pred_region
      %s739 = ssub.s32 %s11, 2
      // Predicated region
      $region49: #{bottleneck_forward.1} parent=47 // pred_check
        %p740 = pneg %p166
      $region50: #{bottleneck_forward.1} parent=47 // pred_check_branch
        %742 = sbr.rel (%p740) target = $region52
      $region51: #{bottleneck_forward.1} parent=47 // pred_region
        %s743 = smul.u32 2, %s23
        %p744 = scmp.lt.s32.totalorder %s22, 1
        %s745 = scalar_select %p744, %s22, 1
        %p746 = scmp.lt.s32.totalorder %s743, 1
        %s747 = scalar_select %p746, %s743, 1
        %s748 = smul.addr %s745, 8
        %s749 = sadd.s32 %s747, %s748
        %s750 = smul.addr %s749, 8
        %s751 = scalar_lea.vmem %s5, %s750
      $region52: #{bottleneck_forward.1} parent=47 // pred_fallthru
        _
    $region48: #{bottleneck_forward.1} parent=5 // pred_fallthru
      _
  $region6: #{bottleneck_forward.1} parent=0 // loop_footer
    %s15 = sadd.s32 1, %s11
  $region7: #{bottleneck_forward.1} parent=0 // loop_footer_branch
    %10 = sbr.rel target = $region3
  $region8: #{bottleneck_forward.1} parent=0 // loop_exit
    _

</llo_original>
